<compile_context>
chip_gen: v6e
topology: v6e:2x2x1
jax: 0.10.0
libtpu: 0.0.40
codegen_flags: <defaults>
</compile_context>

<pallas_src>
import functools

import jax
import jax.numpy as jnp
from jax.experimental import pallas as pl
from jax.experimental.pallas import tpu as pltpu

SEQ_LEN = 100
IN_DIM = 3 * (SEQ_LEN - 1)   # 297
H1 = 128
H2 = 64
OUT_DIM = 3

# Explicit scoped-VMEM budget: ~28 MiB worst-case working set at TB=4096
# (2x f32 x blocks padded to 384 lanes ~ 12 MiB, 2x out blocks ~ 4 MiB,
# f32/bf16 intermediates ~ 11 MiB, weights/biases ~ 0.2 MiB).  48 MiB leaves
# headroom and stays under v7x's 64 MiB physical VMEM per TensorCore.
_VMEM_LIMIT_BYTES = 48 * 1024 * 1024


def _round_up(x, m):
    return ((x + m - 1) // m) * m


def _default_tb():
    """4096 on v6e/v7x, 2048 on v5e (slower HBM -> smaller tile suffices)."""
    try:
        kind = jax.devices()[0].device_kind.lower()
    except Exception:  # pragma: no cover - defensive
        kind = ""
    if "v5 lite" in kind or "v5lite" in kind or "v5e" in kind:
        return 2048
    return 4096


def _mlp_kernel(x_ref, w1_ref, b1_ref, w2_ref, b2_ref, w3_ref, b3_ref, o_ref):
    """Fused Linear-ReLU-Linear-ReLU-Linear on one (TB, IN_DIM) batch tile.

    x arrives as f32 (single HBM pass); matmul operands are bf16 (MXU-native);
    accumulation, bias-add and ReLU stay in f32.
    """
    x = x_ref[...].astype(jnp.bfloat16)                                 # (TB, 297)
    h1 = jnp.dot(x, w1_ref[...], preferred_element_type=jnp.float32)   # (TB, 128) f32
    h1 = jnp.maximum(h1 + b1_ref[...], 0.0)
    h2 = jnp.dot(h1.astype(jnp.bfloat16), w2_ref[...],
                 preferred_element_type=jnp.float32)                   # (TB, 64) f32
    h2 = jnp.maximum(h2 + b2_ref[...], 0.0)
    # Layer 3 (N=3) is <1% of FLOPs/bytes; MXU underutilization here is noise.
    out = jnp.dot(h2.astype(jnp.bfloat16), w3_ref[...],
                  preferred_element_type=jnp.float32)                  # (TB, 3) f32
    o_ref[...] = out + b3_ref[...]


@functools.partial(jax.jit, static_argnames=("tb",))
def so3_encoder_forward(x, params, *, tb=None):
    """x: (B, SEQ_LEN-1, 3) float32 -> (B, 3) float32."""
    w1, b1, w2, b2, w3, b3 = params
    B = x.shape[0]
    # Row-major flatten (identical to nn.Flatten on a contiguous tensor).
    # Kept f32: the kernel casts to bf16 internally, so x crosses HBM once.
    x_flat = x.reshape(B, IN_DIM)

    if tb is None:
        tb = _default_tb()
    if B <= tb:
        tb = B                                 # single block, full batch
    else:
        # Keep >= 2 balanced grid steps (megacore split on v7x via the
        # "parallel" batch axis); tb stays a multiple of 256.
        tb = min(tb, max(256, _round_up(pl.cdiv(B, 2), 256)))
    grid = (pl.cdiv(B, tb),)                   # partial last block handled by Pallas

    x_spec = pl.BlockSpec((tb, IN_DIM), lambda i: (i, 0))
    o_spec = pl.BlockSpec((tb, OUT_DIM), lambda i: (i, 0))

    def const_spec(shape):                     # VMEM-resident across all grid steps
        return pl.BlockSpec(shape, lambda i: (0, 0))

    flops = 2 * B * (IN_DIM * H1 + H1 * H2 + H2 * OUT_DIM)
    bytes_accessed = (
        B * IN_DIM * 4                                  # f32 x stream (single pass)
        + B * OUT_DIM * 4                               # f32 output
        + (IN_DIM * H1 + H1 * H2 + H2 * OUT_DIM) * 2    # bf16 weights
        + (H1 + H2 + OUT_DIM) * 4)                      # f32 biases

    return pl.pallas_call(
        _mlp_kernel,
        out_shape=jax.ShapeDtypeStruct((B, OUT_DIM), jnp.float32),
        grid=grid,
        in_specs=[
            x_spec,
            const_spec((IN_DIM, H1)), const_spec((1, H1)),
            const_spec((H1, H2)), const_spec((1, H2)),
            const_spec((H2, OUT_DIM)), const_spec((1, OUT_DIM)),
        ],
        out_specs=o_spec,
        compiler_params=pltpu.CompilerParams(
            dimension_semantics=("parallel",),
            vmem_limit_bytes=_VMEM_LIMIT_BYTES),
        cost_estimate=pl.CostEstimate(
            flops=flops, bytes_accessed=bytes_accessed, transcendentals=0),
    )(x_flat, w1, b1, w2, b2, w3, b3)


def init_params(key):
    """PyTorch default Linear init (uniform(-1/sqrt(fan_in), 1/sqrt(fan_in))).
    Weights stored bf16 (MXU-native operands); biases stay f32."""
    def linear(key, fan_in, fan_out):
        kw, kb = jax.random.split(key)
        bound = 1.0 / jnp.sqrt(jnp.float32(fan_in))
        w = jax.random.uniform(kw, (fan_in, fan_out), jnp.float32, -bound, bound)
        b = jax.random.uniform(kb, (1, fan_out), jnp.float32, -bound, bound)
        return w.astype(jnp.bfloat16), b

    k1, k2, k3 = jax.random.split(key, 3)
    w1, b1 = linear(k1, IN_DIM, H1)
    w2, b2 = linear(k2, H1, H2)
    w3, b3 = linear(k3, H2, OUT_DIM)
    return (w1, b1, w2, b2, w3, b3)


def _reference(x, params):
    """Pure-JAX reference with the same bf16-operand / f32-accumulation math."""
    w1, b1, w2, b2, w3, b3 = params
    h = x.reshape(x.shape[0], IN_DIM).astype(jnp.bfloat16)
    h = jnp.maximum(
        jnp.dot(h, w1, preferred_element_type=jnp.float32) + b1, 0.0)
    h = jnp.maximum(
        jnp.dot(h.astype(jnp.bfloat16), w2,
                preferred_element_type=jnp.float32) + b2, 0.0)
    return jnp.dot(h.astype(jnp.bfloat16), w3,
                   preferred_element_type=jnp.float32) + b3


if __name__ == "__main__":
    key = jax.random.PRNGKey(0)
    k_params, k_x = jax.random.split(key)

    params = init_params(k_params)
    # Small batch of SO(3)-trajectory-like inputs: (B, SEQ_LEN-1, 3)
    B = 8
    x = jax.random.normal(k_x, (B, SEQ_LEN - 1, 3), dtype=jnp.float32)

    out = so3_encoder_forward(x, params)
    out = jax.block_until_ready(out)

    ref = _reference(x, params)
    assert out.shape == (B, OUT_DIM)
    assert out.dtype == jnp.float32
    assert jnp.allclose(out, ref, atol=5e-3, rtol=5e-3), (
        float(jnp.max(jnp.abs(out - ref))))

    print("KERNEL_OK")
</pallas_src>

<mosaic_0001>
module attributes {stable_mosaic.version = 11 : i64} {
  func.func @_mlp_kernel(%arg0: i32, %arg1: memref<8x297xf32, #tpu.memory_space<vmem>>, %arg2: memref<297x128xbf16, #tpu.memory_space<vmem>>, %arg3: memref<1x128xf32, #tpu.memory_space<vmem>>, %arg4: memref<128x64xbf16, #tpu.memory_space<vmem>>, %arg5: memref<1x64xf32, #tpu.memory_space<vmem>>, %arg6: memref<64x3xbf16, #tpu.memory_space<vmem>>, %arg7: memref<1x3xf32, #tpu.memory_space<vmem>>, %arg8: memref<8x3xf32, #tpu.memory_space<vmem>>) attributes {dimension_semantics = [#tpu.dimension_semantics<parallel>], iteration_bounds = array<i64: 1>, scalar_prefetch = 0 : i64, scratch_operands = 0 : i64, tpu.core_type = #tpu.core_type<tc>, window_params = [{transform_indices = @transform_0, window_bounds = array<i64: 8, 297>}, {pipeline_mode = #tpu.pipeline_mode<synchronous>, transform_indices = @transform_1, window_bounds = array<i64: 297, 128>}, {pipeline_mode = #tpu.pipeline_mode<synchronous>, transform_indices = @transform_2, window_bounds = array<i64: 1, 128>}, {pipeline_mode = #tpu.pipeline_mode<synchronous>, transform_indices = @transform_3, window_bounds = array<i64: 128, 64>}, {pipeline_mode = #tpu.pipeline_mode<synchronous>, transform_indices = @transform_4, window_bounds = array<i64: 1, 64>}, {pipeline_mode = #tpu.pipeline_mode<synchronous>, transform_indices = @transform_5, window_bounds = array<i64: 64, 3>}, {pipeline_mode = #tpu.pipeline_mode<synchronous>, transform_indices = @transform_6, window_bounds = array<i64: 1, 3>}, {transform_indices = @transform_7, window_bounds = array<i64: 8, 3>}]} {
    %c0 = arith.constant 0 : index
    %c0_0 = arith.constant 0 : index
    %0 = vector.load %arg1[%c0, %c0_0] : memref<8x297xf32, #tpu.memory_space<vmem>>, vector<8x297xf32>
    %1 = arith.truncf %0 : vector<8x297xf32> to vector<8x297xbf16>
    %c0_1 = arith.constant 0 : index
    %c0_2 = arith.constant 0 : index
    %2 = vector.load %arg2[%c0_1, %c0_2] : memref<297x128xbf16, #tpu.memory_space<vmem>>, vector<297x128xbf16>
    %cst = arith.constant dense<0.000000e+00> : vector<8x128xf32>
    %3 = tpu.matmul %1, %2, %cst {dimension_numbers = #tpu.dot_dimension_numbers<[1], [0], [0], [1], [0, 0, 1, 1], [], []>} : vector<8x297xbf16>, vector<297x128xbf16>, vector<8x128xf32> -> vector<8x128xf32>
    %c0_3 = arith.constant 0 : index
    %c0_4 = arith.constant 0 : index
    %4 = vector.load %arg3[%c0_3, %c0_4] : memref<1x128xf32, #tpu.memory_space<vmem>>, vector<1x128xf32>
    %5 = vector.broadcast %4 : vector<1x128xf32> to vector<8x128xf32>
    %6 = arith.addf %3, %5 : vector<8x128xf32>
    %cst_5 = arith.constant 0.000000e+00 : f32
    %7 = vector.broadcast %cst_5 : f32 to vector<8x128xf32>
    %8 = arith.maximumf %6, %7 : vector<8x128xf32>
    %9 = arith.truncf %8 : vector<8x128xf32> to vector<8x128xbf16>
    %c0_6 = arith.constant 0 : index
    %c0_7 = arith.constant 0 : index
    %10 = vector.load %arg4[%c0_6, %c0_7] : memref<128x64xbf16, #tpu.memory_space<vmem>>, vector<128x64xbf16>
    %cst_8 = arith.constant dense<0.000000e+00> : vector<8x64xf32>
    %11 = tpu.matmul %9, %10, %cst_8 {dimension_numbers = #tpu.dot_dimension_numbers<[1], [0], [0], [1], [0, 0, 1, 1], [], []>} : vector<8x128xbf16>, vector<128x64xbf16>, vector<8x64xf32> -> vector<8x64xf32>
    %c0_9 = arith.constant 0 : index
    %c0_10 = arith.constant 0 : index
    %12 = vector.load %arg5[%c0_9, %c0_10] : memref<1x64xf32, #tpu.memory_space<vmem>>, vector<1x64xf32>
    %13 = vector.broadcast %12 : vector<1x64xf32> to vector<8x64xf32>
    %14 = arith.addf %11, %13 : vector<8x64xf32>
    %cst_11 = arith.constant 0.000000e+00 : f32
    %15 = vector.broadcast %cst_11 : f32 to vector<8x64xf32>
    %16 = arith.maximumf %14, %15 : vector<8x64xf32>
    %17 = arith.truncf %16 : vector<8x64xf32> to vector<8x64xbf16>
    %c0_12 = arith.constant 0 : index
    %c0_13 = arith.constant 0 : index
    %18 = vector.load %arg6[%c0_12, %c0_13] : memref<64x3xbf16, #tpu.memory_space<vmem>>, vector<64x3xbf16>
    %cst_14 = arith.constant dense<0.000000e+00> : vector<8x3xf32>
    %19 = tpu.matmul %17, %18, %cst_14 {dimension_numbers = #tpu.dot_dimension_numbers<[1], [0], [0], [1], [0, 0, 1, 1], [], []>} : vector<8x64xbf16>, vector<64x3xbf16>, vector<8x3xf32> -> vector<8x3xf32>
    %c0_15 = arith.constant 0 : index
    %c0_16 = arith.constant 0 : index
    %20 = vector.load %arg7[%c0_15, %c0_16] : memref<1x3xf32, #tpu.memory_space<vmem>>, vector<1x3xf32>
    %21 = vector.broadcast %20 : vector<1x3xf32> to vector<8x3xf32>
    %22 = arith.addf %19, %21 : vector<8x3xf32>
    %c0_17 = arith.constant 0 : index
    %c0_18 = arith.constant 0 : index
    %23 = vector.load %arg8[%c0_17, %c0_18] : memref<8x3xf32, #tpu.memory_space<vmem>>, vector<8x3xf32>
    tpu.vector_store %arg8[%c0_17, %c0_18], %22 {strides = array<i32>} : memref<8x3xf32, #tpu.memory_space<vmem>>, vector<8x3xf32>,
    return
  }
  func.func @transform_0(%arg0: i32) -> (i32, i32) {
    %c0_i32 = arith.constant 0 : i32
    %c0_i32_0 = arith.constant 0 : i32
    return %arg0, %c0_i32 : i32, i32
  }
  func.func @transform_1(%arg0: i32) -> (i32, i32) {
    %c0_i32 = arith.constant 0 : i32
    %c0_i32_0 = arith.constant 0 : i32
    %c0_i32_1 = arith.constant 0 : i32
    return %c0_i32, %c0_i32_0 : i32, i32
  }
  func.func @transform_2(%arg0: i32) -> (i32, i32) {
    %c0_i32 = arith.constant 0 : i32
    %c0_i32_0 = arith.constant 0 : i32
    %c0_i32_1 = arith.constant 0 : i32
    return %c0_i32, %c0_i32_0 : i32, i32
  }
  func.func @transform_3(%arg0: i32) -> (i32, i32) {
    %c0_i32 = arith.constant 0 : i32
    %c0_i32_0 = arith.constant 0 : i32
    %c0_i32_1 = arith.constant 0 : i32
    return %c0_i32, %c0_i32_0 : i32, i32
  }
  func.func @transform_4(%arg0: i32) -> (i32, i32) {
    %c0_i32 = arith.constant 0 : i32
    %c0_i32_0 = arith.constant 0 : i32
    %c0_i32_1 = arith.constant 0 : i32
    return %c0_i32, %c0_i32_0 : i32, i32
  }
  func.func @transform_5(%arg0: i32) -> (i32, i32) {
    %c0_i32 = arith.constant 0 : i32
    %c0_i32_0 = arith.constant 0 : i32
    %c0_i32_1 = arith.constant 0 : i32
    return %c0_i32, %c0_i32_0 : i32, i32
  }
  func.func @transform_6(%arg0: i32) -> (i32, i32) {
    %c0_i32 = arith.constant 0 : i32
    %c0_i32_0 = arith.constant 0 : i32
    %c0_i32_1 = arith.constant 0 : i32
    return %c0_i32, %c0_i32_0 : i32, i32
  }
  func.func @transform_7(%arg0: i32) -> (i32, i32) {
    %c0_i32 = arith.constant 0 : i32
    %c0_i32_0 = arith.constant 0 : i32
    return %arg0, %c0_i32 : i32, i32
  }
}

</mosaic_0001>

<llo_original>
// kernel: so3_encoder_forward.1
$region0: #{so3_encoder_forward.1}
  #allocation0 [shape = 'u32[]', space=smem, size = 0x4, offset = 0x4, fixed_abs, tag = 'smem constant byte address 0x4 - core index']
  #allocation1 [shape = 'u32[144,128]{1,0:T(1,128)}', space=vmem, size = 0x12000, scoped, tag = 'internal scratch']
  %s0 = inlined_call_operand.vmem [shape: f32[8,297], index: 0, kind: input, shape index: {}]
  %s1 = inlined_call_operand.vmem [shape: bf16[297,128], index: 1, kind: input, shape index: {}]
  %s2 = inlined_call_operand.vmem [shape: f32[1,128], index: 2, kind: input, shape index: {}]
  %s3 = inlined_call_operand.vmem [shape: bf16[128,64], index: 3, kind: input, shape index: {}]
  %s4 = inlined_call_operand.vmem [shape: f32[1,64], index: 4, kind: input, shape index: {}]
  %s5 = inlined_call_operand.vmem [shape: bf16[64,3], index: 5, kind: input, shape index: {}]
  %s6 = inlined_call_operand.vmem [shape: f32[1,3], index: 6, kind: input, shape index: {}]
  %s7 = inlined_call_operand.vmem [shape: f32[8,3], index: 7, kind: output, shape index: {}]
  %s8 = sld [smem:[#allocation0]]
  $region38: #{so3_encoder_forward.1} parent=0
    _
  %s10 = ssub.s32 1, %s8
  %s11 = scalar_select 0, %s10, %s8
  // Predicated region
  $region2: #{so3_encoder_forward.1} parent=0 // pred_check
    _
  $region3: #{so3_encoder_forward.1} parent=0 // pred_check_branch
    %13 = sbr.rel (0) target = $region5
  $region4: #{so3_encoder_forward.1} parent=0 // pred_region
    _
  $region5: #{so3_encoder_forward.1} parent=0 // pred_fallthru
    _
  // Predicated region
  $region6: #{so3_encoder_forward.1} parent=0 // pred_check
    _
  $region7: #{so3_encoder_forward.1} parent=0 // pred_check_branch
    %15 = sbr.rel (0) target = $region9
  $region8: #{so3_encoder_forward.1} parent=0 // pred_region
    _
  $region9: #{so3_encoder_forward.1} parent=0 // pred_fallthru
    _
  // Predicated region
  $region10: #{so3_encoder_forward.1} parent=0 // pred_check
    _
  $region11: #{so3_encoder_forward.1} parent=0 // pred_check_branch
    %17 = sbr.rel (0) target = $region13
  $region12: #{so3_encoder_forward.1} parent=0 // pred_region
    _
  $region13: #{so3_encoder_forward.1} parent=0 // pred_fallthru
    _
  // Predicated region
  $region14: #{so3_encoder_forward.1} parent=0 // pred_check
    _
  $region15: #{so3_encoder_forward.1} parent=0 // pred_check_branch
    %19 = sbr.rel (0) target = $region17
  $region16: #{so3_encoder_forward.1} parent=0 // pred_region
    _
  $region17: #{so3_encoder_forward.1} parent=0 // pred_fallthru
    _
  // Predicated region
  $region18: #{so3_encoder_forward.1} parent=0 // pred_check
    _
  $region19: #{so3_encoder_forward.1} parent=0 // pred_check_branch
    %21 = sbr.rel (0) target = $region21
  $region20: #{so3_encoder_forward.1} parent=0 // pred_region
    _
  $region21: #{so3_encoder_forward.1} parent=0 // pred_fallthru
    _
  // Predicated region
  $region22: #{so3_encoder_forward.1} parent=0 // pred_check
    _
  $region23: #{so3_encoder_forward.1} parent=0 // pred_check_branch
    %23 = sbr.rel (0) target = $region25
  $region24: #{so3_encoder_forward.1} parent=0 // pred_region
    _
  $region25: #{so3_encoder_forward.1} parent=0 // pred_fallthru
    _
  // Predicated region
  $region26: #{so3_encoder_forward.1} parent=0 // pred_check
    _
  $region27: #{so3_encoder_forward.1} parent=0 // pred_check_branch
    %25 = sbr.rel (0) target = $region29
  $region28: #{so3_encoder_forward.1} parent=0 // pred_region
    _
  $region29: #{so3_encoder_forward.1} parent=0 // pred_fallthru
    _
  %v27 = vld [vmem:[%s0] sm:$0xff]
  %v28 = vld [vmem:[%s0 + $0x8] sm:$0xff]
  %v29 = vld [vmem:[%s0 + $0x10] sm:$0xff]
  %v30 = vpack.c.bf16 %v27, %v27
  %v31 = vpack.c.bf16 %v28, %v28
  %v32 = vpack.c.bf16 %v29, %v29
  %v33 = vld [vmem:[%s1] sm:$0xf]
  %v34 = vld [vmem:[%s1 + $0x4] sm:$0xf]
  %v35 = vld [vmem:[%s1 + $0x8] sm:$0xf]
  %v36 = vld [vmem:[%s1 + $0xc] sm:$0xf]
  %v37 = vld [vmem:[%s1 + $0x10] sm:$0xf]
  %v38 = vld [vmem:[%s1 + $0x14] sm:$0xf]
  %v39 = vld [vmem:[%s1 + $0x18] sm:$0xf]
  %v40 = vld [vmem:[%s1 + $0x1c] sm:$0xf]
  %v41 = vld [vmem:[%s1 + $0x20] sm:$0xf]
  %v42 = vld [vmem:[%s1 + $0x24] sm:$0xf]
  %v43 = vld [vmem:[%s1 + $0x28] sm:$0xf]
  %v44 = vld [vmem:[%s1 + $0x2c] sm:$0xf]
  %v45 = vld [vmem:[%s1 + $0x30] sm:$0xf]
  %v46 = vld [vmem:[%s1 + $0x34] sm:$0xf]
  %v47 = vld [vmem:[%s1 + $0x38] sm:$0xf]
  %v48 = vld [vmem:[%s1 + $0x3c] sm:$0xf]
  %v49 = vld [vmem:[%s1 + $0x40] sm:$0xf]
  %v50 = vld [vmem:[%s1 + $0x44] sm:$0xf]
  %v51 = vld [vmem:[%s1 + $0x48] sm:$0xf]
  %v52 = vld [vmem:[%s1 + $0x4c] sm:$0xf]
  %v53 = vld [vmem:[%s1 + $0x50] sm:$0xf]
  %v54 = vld [vmem:[%s1 + $0x54] sm:$0xf]
  %v55 = vld [vmem:[%s1 + $0x58] sm:$0xf]
  %v56 = vld [vmem:[%s1 + $0x5c] sm:$0xf]
  %v57 = vld [vmem:[%s1 + $0x60] sm:$0xf]
  %v58 = vld [vmem:[%s1 + $0x64] sm:$0xf]
  %v59 = vld [vmem:[%s1 + $0x68] sm:$0xf]
  %v60 = vld [vmem:[%s1 + $0x6c] sm:$0xf]
  %v61 = vld [vmem:[%s1 + $0x70] sm:$0xf]
  %v62 = vld [vmem:[%s1 + $0x74] sm:$0xf]
  %v63 = vld [vmem:[%s1 + $0x78] sm:$0xf]
  %v64 = vld [vmem:[%s1 + $0x7c] sm:$0xf]
  %v65 = vld [vmem:[%s1 + $0x80] sm:$0xf]
  %v66 = vld [vmem:[%s1 + $0x84] sm:$0xf]
  %v67 = vld [vmem:[%s1 + $0x88] sm:$0xf]
  %v68 = vld [vmem:[%s1 + $0x8c] sm:$0xf]
  %v69 = vld [vmem:[%s1 + $0x90] sm:$0xf]
  %v70 = vld [vmem:[%s1 + $0x94] sm:$0x1]
  %v71 = vld [vmem:[%s2] sm:$0x1]
  %v73 = vlaneseq
  %v74 = vshrl.u32 %v73, 7
  %v75 = vsub.s32 0, %v74
  %v76 = vrot.slane %v71, %v75
  %v116 = vunpack.c.l.b16 %v33
  %v117 = vunpack.c.l.b16 %v34
  %v118 = vunpack.c.l.b16 %v35
  %v119 = vunpack.c.l.b16 %v36
  %v120 = vunpack.c.l.b16 %v37
  %v121 = vunpack.c.l.b16 %v38
  %v122 = vunpack.c.l.b16 %v39
  %v123 = vunpack.c.l.b16 %v40
  %v124 = vunpack.c.l.b16 %v41
  %v125 = vunpack.c.l.b16 %v42
  %v126 = vunpack.c.l.b16 %v43
  %v127 = vunpack.c.l.b16 %v44
  %v128 = vunpack.c.l.b16 %v45
  %v129 = vunpack.c.l.b16 %v46
  %v130 = vunpack.c.l.b16 %v47
  %v131 = vunpack.c.l.b16 %v48
  %v132 = vunpack.c.l.b16 %v49
  %v133 = vunpack.c.l.b16 %v50
  %v134 = vunpack.c.l.b16 %v51
  %v135 = vunpack.c.l.b16 %v52
  %v136 = vunpack.c.l.b16 %v53
  %v137 = vunpack.c.l.b16 %v54
  %v138 = vunpack.c.l.b16 %v55
  %v139 = vunpack.c.l.b16 %v56
  %v140 = vunpack.c.l.b16 %v57
  %v141 = vunpack.c.l.b16 %v58
  %v142 = vunpack.c.l.b16 %v59
  %v143 = vunpack.c.l.b16 %v60
  %v144 = vunpack.c.l.b16 %v61
  %v145 = vunpack.c.l.b16 %v62
  %v146 = vunpack.c.l.b16 %v63
  %v147 = vunpack.c.l.b16 %v64
  %v148 = vunpack.c.l.b16 %v65
  %v149 = vunpack.c.l.b16 %v66
  %v150 = vunpack.c.l.b16 %v67
  %v151 = vunpack.c.l.b16 %v68
  %v152 = vunpack.c.l.b16 %v69
  %v153 = vunpack.c.l.b16 %v70
  %v154 = vpack.c.b16 %v117, %v116
  %v155 = vpack.c.b16 %v119, %v118
  %v156 = vpack.c.b16 %v121, %v120
  %v157 = vpack.c.b16 %v123, %v122
  %v158 = vpack.c.b16 %v125, %v124
  %v159 = vpack.c.b16 %v127, %v126
  %v160 = vpack.c.b16 %v129, %v128
  %v161 = vpack.c.b16 %v131, %v130
  %v162 = vpack.c.b16 %v133, %v132
  %v163 = vpack.c.b16 %v135, %v134
  %v164 = vpack.c.b16 %v137, %v136
  %v165 = vpack.c.b16 %v139, %v138
  %v166 = vpack.c.b16 %v141, %v140
  %v167 = vpack.c.b16 %v143, %v142
  %v168 = vpack.c.b16 %v145, %v144
  %v169 = vpack.c.b16 %v147, %v146
  %v170 = vpack.c.b16 %v149, %v148
  %v171 = vpack.c.b16 %v151, %v150
  %v172 = vpack.c.b16 %v153, %v152
  %vm191 = vcmask 334848
  %v193 = vsel %vm191, %v32, 0
  %vm195 = vcmask 1043456
  %vm196 = vcmask 1044480
  %v197 = vsel %vm195, 4294967295, 65535
  %v198 = vsel %vm196, %v197, 0
  %v200 = vand.u32 %v172, %v198
  %202 = vmatprep.subr.bf16.mxu0 0
  %203 = vmatpush1.bf16.msra.mxu0 %v161
  %204 = vmatprep.subr.bf16.mxu0 0
  %205 = vmatpush1.bf16.msra.mxu0 %v160
  %206 = vmatprep.subr.bf16.mxu0 0
  %207 = vmatpush1.bf16.msra.mxu0 %v159
  %208 = vmatprep.subr.bf16.mxu0 0
  %209 = vmatpush1.bf16.msra.mxu0 %v158
  %210 = vmatprep.subr.bf16.mxu0 0
  %211 = vmatpush1.bf16.msra.mxu0 %v157
  %212 = vmatprep.subr.bf16.mxu0 0
  %213 = vmatpush1.bf16.msra.mxu0 %v156
  %214 = vmatprep.subr.bf16.mxu0 0
  %215 = vmatpush1.bf16.msra.mxu0 %v155
  %216 = vmatprep.subr.bf16.mxu0 0
  %217 = vmatpush1.bf16.msra.mxu0 %v154
  %218 = vmatprep.subr.bf16.mxu0 0
  %219 = vmatpush2.bf16.msra.mxu0 %v169
  %220 = vmatprep.subr.bf16.mxu0 0
  %221 = vmatpush2.bf16.msra.mxu0 %v168
  %222 = vmatprep.subr.bf16.mxu0 0
  %223 = vmatpush2.bf16.msra.mxu0 %v167
  %224 = vmatprep.subr.bf16.mxu0 0
  %225 = vmatpush2.bf16.msra.mxu0 %v166
  %226 = vmatprep.subr.bf16.mxu0 0
  %227 = vmatpush2.bf16.msra.mxu0 %v165
  %228 = vmatprep.subr.bf16.mxu0 0
  %229 = vmatpush2.bf16.msra.mxu0 %v164
  %230 = vmatprep.subr.bf16.mxu0 0
  %231 = vmatpush2.bf16.msra.mxu0 %v163
  %232 = vmatprep.subr.bf16.mxu0 0
  %233 = vmatpush2.bf16.msra.mxu0 %v162
  %234 = vmatprep.mubr.bf16.mxu0 %v31
  %235 = vmatmul.mubr.bf16.gmra.mxu0 %v30
  %v236 = vpop.f32.mrf.mxu0
  %v237 = vadd.f32 %v76, %v236
  %v238 = vpop.f32.mrf.mxu0
  %v239 = vpop.f32.mrf.mxu0
  %v240 = vpop.f32.mrf.mxu0
  %241 = vdwg.mxu0
  %242 = vmatprep.subr.bf16.mxu0 0
  %243 = vmatpush1.bf16.msra.mxu0 0
  %244 = vmatprep.subr.bf16.mxu0 0
  %245 = vmatpush1.bf16.msra.mxu0 0
  %246 = vmatprep.subr.bf16.mxu0 0
  %247 = vmatpush1.bf16.msra.mxu0 0
  %248 = vmatprep.subr.bf16.mxu0 0
  %249 = vmatpush1.bf16.msra.mxu0 0
  %250 = vmatprep.subr.bf16.mxu0 0
  %251 = vmatpush1.bf16.msra.mxu0 0
  %252 = vmatprep.subr.bf16.mxu0 0
  %253 = vmatpush1.bf16.msra.mxu0 %v200
  %254 = vmatprep.subr.bf16.mxu0 0
  %255 = vmatpush1.bf16.msra.mxu0 %v171
  %256 = vmatprep.subr.bf16.mxu0 0
  %257 = vmatpush1.bf16.msra.mxu0 %v170
  %258 = vmatprep.subr.bf16.mxu0 0
  %259 = vmatpush2.bf16.msra.mxu0 0
  %260 = vmatprep.subr.bf16.mxu0 0
  %261 = vmatpush2.bf16.msra.mxu0 0
  %262 = vmatprep.subr.bf16.mxu0 0
  %263 = vmatpush2.bf16.msra.mxu0 0
  %264 = vmatprep.subr.bf16.mxu0 0
  %265 = vmatpush2.bf16.msra.mxu0 0
  %266 = vmatprep.subr.bf16.mxu0 0
  %267 = vmatpush2.bf16.msra.mxu0 0
  %268 = vmatprep.subr.bf16.mxu0 0
  %269 = vmatpush2.bf16.msra.mxu0 0
  %270 = vmatprep.subr.bf16.mxu0 0
  %271 = vmatpush2.bf16.msra.mxu0 0
  %272 = vmatprep.subr.bf16.mxu0 0
  %273 = vmatpush2.bf16.msra.mxu0 0
  %274 = vmatprep.mubr.bf16.mxu0 0
  %275 = vmatmul.mubr.bf16.gmra.mxu0 %v193
  %v276 = vpop.f32.mrf.mxu0
  %v277 = vadd.f32 %v237, %v276
  %v278 = vpop.f32.mrf.mxu0
  %v279 = vpop.f32.mrf.mxu0
  %v280 = vpop.f32.mrf.mxu0
  %281 = vdwg.mxu0
  %v282 = vmax.f32 %v277, 0.0
  %v283 = vpack.c.bf16 %v282, %v282
  %v284 = vld [vmem:[%s3] sm:$0xf]
  %v285 = vld [vmem:[%s3 + $0x4] sm:$0xf]
  %v286 = vld [vmem:[%s3 + $0x8] sm:$0xf]
  %v287 = vld [vmem:[%s3 + $0xc] sm:$0xf]
  %v288 = vld [vmem:[%s3 + $0x10] sm:$0xf]
  %v289 = vld [vmem:[%s3 + $0x14] sm:$0xf]
  %v290 = vld [vmem:[%s3 + $0x18] sm:$0xf]
  %v291 = vld [vmem:[%s3 + $0x1c] sm:$0xf]
  %v292 = vld [vmem:[%s3 + $0x20] sm:$0xf]
  %v293 = vld [vmem:[%s3 + $0x24] sm:$0xf]
  %v294 = vld [vmem:[%s3 + $0x28] sm:$0xf]
  %v295 = vld [vmem:[%s3 + $0x2c] sm:$0xf]
  %v296 = vld [vmem:[%s3 + $0x30] sm:$0xf]
  %v297 = vld [vmem:[%s3 + $0x34] sm:$0xf]
  %v298 = vld [vmem:[%s3 + $0x38] sm:$0xf]
  %v299 = vld [vmem:[%s3 + $0x3c] sm:$0xf]
  %v300 = vld [vmem:[%s4] sm:$0x1]
  %v302 = vlaneseq
  %v303 = vshrl.u32 %v302, 7
  %v304 = vsub.s32 0, %v303
  %v305 = vrot.slane %v300, %v304
  %v323 = vunpack.c.l.b16 %v284
  %v324 = vunpack.c.l.b16 %v285
  %v325 = vunpack.c.l.b16 %v286
  %v326 = vunpack.c.l.b16 %v287
  %v327 = vunpack.c.l.b16 %v288
  %v328 = vunpack.c.l.b16 %v289
  %v329 = vunpack.c.l.b16 %v290
  %v330 = vunpack.c.l.b16 %v291
  %v331 = vunpack.c.l.b16 %v292
  %v332 = vunpack.c.l.b16 %v293
  %v333 = vunpack.c.l.b16 %v294
  %v334 = vunpack.c.l.b16 %v295
  %v335 = vunpack.c.l.b16 %v296
  %v336 = vunpack.c.l.b16 %v297
  %v337 = vunpack.c.l.b16 %v298
  %v338 = vunpack.c.l.b16 %v299
  %v339 = vpack.c.b16 %v324, %v323
  %v340 = vpack.c.b16 %v326, %v325
  %v341 = vpack.c.b16 %v328, %v327
  %v342 = vpack.c.b16 %v330, %v329
  %v343 = vpack.c.b16 %v332, %v331
  %v344 = vpack.c.b16 %v334, %v333
  %v345 = vpack.c.b16 %v336, %v335
  %v346 = vpack.c.b16 %v338, %v337
  %355 = vmatprep.subr.bf16.mxu0 0
  %356 = vmatpush1.bf16.msra.mxu0 %v346
  %357 = vmatprep.subr.bf16.mxu0 0
  %358 = vmatpush1.bf16.msra.mxu0 %v345
  %359 = vmatprep.subr.bf16.mxu0 0
  %360 = vmatpush1.bf16.msra.mxu0 %v344
  %361 = vmatprep.subr.bf16.mxu0 0
  %362 = vmatpush1.bf16.msra.mxu0 %v343
  %363 = vmatprep.subr.bf16.mxu0 0
  %364 = vmatpush1.bf16.msra.mxu0 %v342
  %365 = vmatprep.subr.bf16.mxu0 0
  %366 = vmatpush1.bf16.msra.mxu0 %v341
  %367 = vmatprep.subr.bf16.mxu0 0
  %368 = vmatpush1.bf16.msra.mxu0 %v340
  %369 = vmatprep.subr.bf16.mxu0 0
  %370 = vmatpush1.bf16.msra.mxu0 %v339
  %371 = vmatprep.subr.bf16.mxu0 0
  %372 = vmatpush2.bf16.msra.mxu0 0
  %373 = vmatprep.subr.bf16.mxu0 0
  %374 = vmatpush2.bf16.msra.mxu0 0
  %375 = vmatprep.subr.bf16.mxu0 0
  %376 = vmatpush2.bf16.msra.mxu0 0
  %377 = vmatprep.subr.bf16.mxu0 0
  %378 = vmatpush2.bf16.msra.mxu0 0
  %379 = vmatprep.subr.bf16.mxu0 0
  %380 = vmatpush2.bf16.msra.mxu0 0
  %381 = vmatprep.subr.bf16.mxu0 0
  %382 = vmatpush2.bf16.msra.mxu0 0
  %383 = vmatprep.subr.bf16.mxu0 0
  %384 = vmatpush2.bf16.msra.mxu0 0
  %385 = vmatprep.subr.bf16.mxu0 0
  %386 = vmatpush2.bf16.msra.mxu0 0
  %387 = vmatprep.mubr.bf16.mxu0 0
  %388 = vmatmul.mubr.bf16.gmra.mxu0 %v283
  %v389 = vpop.f32.mrf.mxu0
  %v390 = vadd.f32 %v305, %v389
  %v391 = vpop.f32.mrf.mxu0
  %v392 = vpop.f32.mrf.mxu0
  %v393 = vpop.f32.mrf.mxu0
  %394 = vdwg.mxu0
  %v395 = vmax.f32 %v390, 0.0
  %v396 = vpack.c.bf16 %v395, %v395
  %v397 = vld [vmem:[%s5] sm:$0xf]
  %v398 = vld [vmem:[%s5 + $0x4] sm:$0xf]
  %v399 = vld [vmem:[%s5 + $0x8] sm:$0xf]
  %v400 = vld [vmem:[%s5 + $0xc] sm:$0xf]
  %v401 = vld [vmem:[%s5 + $0x10] sm:$0xf]
  %v402 = vld [vmem:[%s5 + $0x14] sm:$0xf]
  %v403 = vld [vmem:[%s5 + $0x18] sm:$0xf]
  %v404 = vld [vmem:[%s5 + $0x1c] sm:$0xf]
  %v405 = vld [vmem:[%s6] sm:$0x1]
  %v407 = vlaneseq
  %v408 = vshrl.u32 %v407, 7
  %v409 = vsub.s32 0, %v408
  %v410 = vrot.slane %v405, %v409
  %v420 = vunpack.c.l.b16 %v397
  %v421 = vunpack.c.l.b16 %v398
  %v422 = vunpack.c.l.b16 %v399
  %v423 = vunpack.c.l.b16 %v400
  %v424 = vunpack.c.l.b16 %v401
  %v425 = vunpack.c.l.b16 %v402
  %v426 = vunpack.c.l.b16 %v403
  %v427 = vunpack.c.l.b16 %v404
  %v428 = vpack.c.b16 %v421, %v420
  %v429 = vpack.c.b16 %v423, %v422
  %v430 = vpack.c.b16 %v425, %v424
  %v431 = vpack.c.b16 %v427, %v426
  %vm436 = vcmask 523264
  %v438 = vsel %vm436, %v396, 0
  %440 = vmatprep.subr.bf16.mxu0 0
  %441 = vmatpush1.bf16.msra.mxu0 0
  %442 = vmatprep.subr.bf16.mxu0 0
  %443 = vmatpush1.bf16.msra.mxu0 0
  %444 = vmatprep.subr.bf16.mxu0 0
  %445 = vmatpush1.bf16.msra.mxu0 0
  %446 = vmatprep.subr.bf16.mxu0 0
  %447 = vmatpush1.bf16.msra.mxu0 0
  %448 = vmatprep.subr.bf16.mxu0 0
  %449 = vmatpush1.bf16.msra.mxu0 %v431
  %450 = vmatprep.subr.bf16.mxu0 0
  %451 = vmatpush1.bf16.msra.mxu0 %v430
  %452 = vmatprep.subr.bf16.mxu0 0
  %453 = vmatpush1.bf16.msra.mxu0 %v429
  %454 = vmatprep.subr.bf16.mxu0 0
  %455 = vmatpush1.bf16.msra.mxu0 %v428
  %456 = vmatprep.subr.bf16.mxu0 0
  %457 = vmatpush2.bf16.msra.mxu0 0
  %458 = vmatprep.subr.bf16.mxu0 0
  %459 = vmatpush2.bf16.msra.mxu0 0
  %460 = vmatprep.subr.bf16.mxu0 0
  %461 = vmatpush2.bf16.msra.mxu0 0
  %462 = vmatprep.subr.bf16.mxu0 0
  %463 = vmatpush2.bf16.msra.mxu0 0
  %464 = vmatprep.subr.bf16.mxu0 0
  %465 = vmatpush2.bf16.msra.mxu0 0
  %466 = vmatprep.subr.bf16.mxu0 0
  %467 = vmatpush2.bf16.msra.mxu0 0
  %468 = vmatprep.subr.bf16.mxu0 0
  %469 = vmatpush2.bf16.msra.mxu0 0
  %470 = vmatprep.subr.bf16.mxu0 0
  %471 = vmatpush2.bf16.msra.mxu0 0
  %472 = vmatprep.mubr.bf16.mxu0 0
  %473 = vmatmul.mubr.bf16.gmra.mxu0 %v438
  %v474 = vpop.f32.mrf.mxu0
  %v475 = vadd.f32 %v410, %v474
  %v476 = vpop.f32.mrf.mxu0
  %v477 = vpop.f32.mrf.mxu0
  %v478 = vpop.f32.mrf.mxu0
  %479 = vdwg.mxu0
  %vm480 = vcmask 23552
  %481 = vst.msk [vmem:[%s7] sm:$0xff] %vm480, %v475
  // Predicated region
  $region30: #{so3_encoder_forward.1} parent=0 // pred_check
    _
  $region31: #{so3_encoder_forward.1} parent=0 // pred_check_branch
    %483 = sbr.rel (0) target = $region33
  $region32: #{so3_encoder_forward.1} parent=0 // pred_region
    _
  $region33: #{so3_encoder_forward.1} parent=0 // pred_fallthru
    _
  // Predicated region
  $region34: #{so3_encoder_forward.1} parent=0 // pred_check
    _
  $region35: #{so3_encoder_forward.1} parent=0 // pred_check_branch
    %485 = sbr.rel (0) target = $region37
  $region36: #{so3_encoder_forward.1} parent=0 // pred_region
    _
  $region37: #{so3_encoder_forward.1} parent=0 // pred_fallthru
    _

</llo_original>
